<compile_context>
chip_gen: v5e
topology: v5e:2x2
jax: 0.10.0
libtpu: 0.0.40
codegen_flags: <defaults>
</compile_context>

<pallas_src>
import math
from functools import partial

import jax
import jax.numpy as jnp
from jax import lax
from jax.experimental import pallas as pl
from jax.experimental.pallas import tpu as pltpu


# ----------------------------------------------------------------------------
# Per-generation VMEM budget (v5e/v6e: 128 MiB physical -> ~96 MiB; v7x: 64 -> 48)
# ----------------------------------------------------------------------------
def _vmem_limit_bytes():
    cap = None
    try:
        info = pltpu.get_tpu_info()
        for name in ("vmem_capacity_bytes", "vmem_size_bytes", "vmem_bytes"):
            cap = getattr(info, name, None)
            if cap:
                break
    except Exception:
        cap = None
    if not cap:
        cap = 64 * 1024 * 1024          # conservative fallback (v7x per-TC)
    return int(min(cap * 3 // 4, 96 * 1024 * 1024))


_VMEM_LIMIT = _vmem_limit_bytes()


def _round_up(x, m):
    return ((x + m - 1) // m) * m


def _pick_tile(dim, target, multiple=1):
    """Largest tile <= target that divides `dim` and is a multiple of `multiple`
    (falls back to the full dimension, which always satisfies TPU tiling rules)."""
    if dim <= target:
        return dim
    t = (target // multiple) * multiple
    while t >= multiple:
        if dim % t == 0:
            return t
        t -= multiple
    return dim


# ----------------------------------------------------------------------------
# Tiled linear projection:  y = (x @ W^T + b) * scale_row
#   x: (M, Din), W: (Dout, Din) (PyTorch nn.Linear layout), b/scale: (Dout,)
#   The per-column scale row lets us fold 1/sqrt(d_k) into the Wq columns of the
#   fused QKV projection for free (applied once, at finalize).
# ----------------------------------------------------------------------------
def _linear_kernel(x_ref, w_ref, b_ref, s_ref, o_ref, acc_ref):
    kk = pl.program_id(2)

    @pl.when(kk == 0)
    def _init():
        acc_ref[...] = jnp.zeros_like(acc_ref)

    # Contract last dims of x:(tm, tk) and w:(tn, tk) -> (tm, tn); no explicit
    # transpose, f32 accumulation on the MXU.
    acc_ref[...] += lax.dot_general(
        x_ref[...], w_ref[...],
        dimension_numbers=(((1,), (1,)), ((), ())),
        preferred_element_type=jnp.float32)

    @pl.when(kk == pl.num_programs(2) - 1)
    def _finalize():
        y = acc_ref[...] + b_ref[...].astype(jnp.float32)
        o_ref[...] = (y * s_ref[...].astype(jnp.float32)).astype(o_ref.dtype)


def linear(x2d, weight, bias, out_scale=None):
    """x2d: (M, Din), weight: (Dout, Din), bias: (Dout,) -> (M, Dout).
    out_scale: optional (Dout,) per-column scale applied after the bias."""
    M, Din = x2d.shape
    Dout = weight.shape[0]

    # Pad rows to a multiple of 8 so a multiple-of-8 row tile always exists
    # (avoids the full-dim fallback -> VMEM blowup for awkward M).
    M_pad = _round_up(max(M, 8), 8)
    if M_pad != M:
        x2d = jnp.pad(x2d, ((0, M_pad - M), (0, 0)))

    tm = _pick_tile(M_pad, 512, 8)
    tn = _pick_tile(Dout, 512, 128)
    tk = _pick_tile(Din, 1024, 128)

    b2d = bias.reshape(1, Dout)
    if out_scale is None:
        out_scale = jnp.ones((Dout,), jnp.float32)
    s2d = out_scale.reshape(1, Dout).astype(jnp.float32)

    grid = (M_pad // tm, Dout // tn, Din // tk)
    out = pl.pallas_call(
        _linear_kernel,
        out_shape=jax.ShapeDtypeStruct((M_pad, Dout), x2d.dtype),
        grid_spec=pltpu.PrefetchScalarGridSpec(
            num_scalar_prefetch=0,
            grid=grid,
            in_specs=[
                pl.BlockSpec((tm, tk), lambda i, j, kk: (i, kk)),
                pl.BlockSpec((tn, tk), lambda i, j, kk: (j, kk)),
                pl.BlockSpec((1, tn), lambda i, j, kk: (0, j)),
                pl.BlockSpec((1, tn), lambda i, j, kk: (0, j)),
            ],
            out_specs=pl.BlockSpec((tm, tn), lambda i, j, kk: (i, j)),
            scratch_shapes=[pltpu.VMEM((tm, tn), jnp.float32)],
        ),
        compiler_params=pltpu.CompilerParams(
            dimension_semantics=("parallel", "parallel", "arbitrary"),
            vmem_limit_bytes=_VMEM_LIMIT),
        cost_estimate=pl.CostEstimate(
            flops=2 * M_pad * Din * Dout,
            transcendentals=0,
            bytes_accessed=int((M_pad * Din * (Dout // tn)
                                + Dout * Din * (M_pad // tm)
                                + M_pad * Dout) * x2d.dtype.itemsize)),
    )(x2d, weight, b2d, s2d)
    return out[:M] if M_pad != M else out


# ----------------------------------------------------------------------------
# Flash-style causal attention.
#   q, k, v: (B, H, S, d_k); one head per grid step; kernel tiles (tq, d_k)/(tk, d_k)
#   grid: (B, H, S/tq, S/tk), kv axis innermost + "arbitrary" (reduction).
#   The 1/sqrt(d_k) scale is already folded into q by the projection kernel.
# ----------------------------------------------------------------------------
def _flash_attention_kernel(q_ref, k_ref, v_ref, o_ref, m_ref, l_ref, acc_ref,
                            *, tq, tk):
    qi = pl.program_id(2)
    ki = pl.program_id(3)
    nk = pl.num_programs(3)

    @pl.when(ki == 0)
    def _init():
        m_ref[...] = jnp.full_like(m_ref, -jnp.inf)
        l_ref[...] = jnp.zeros_like(l_ref)
        acc_ref[...] = jnp.zeros_like(acc_ref)

    q_first_row = qi * tq
    q_last_row = q_first_row + (tq - 1)
    k_first_col = ki * tk
    k_last_col = k_first_col + (tk - 1)

    # Fully below the diagonal -> no masking needed; straddling -> mask; fully
    # above -> skipped entirely (and its K/V DMA is suppressed by the clamped
    # index_map in the wrapper).
    below_diag = k_last_col <= q_first_row
    on_diag = jnp.logical_and(k_first_col <= q_last_row,
                              jnp.logical_not(below_diag))

    def _accumulate(apply_mask):
        q = q_ref[...]
        k = k_ref[...]
        v = v_ref[...]
        # (tq, d) x (tk, d) -> (tq, tk); contract last dims, f32 acc on the MXU.
        s = lax.dot_general(q, k, dimension_numbers=(((1,), (1,)), ((), ())),
                            preferred_element_type=jnp.float32)
        if apply_mask:
            rows = q_first_row + lax.broadcasted_iota(jnp.int32, (tq, tk), 0)
            cols = k_first_col + lax.broadcasted_iota(jnp.int32, (tq, tk), 1)
            s = jnp.where(cols <= rows, s, -jnp.inf)

        # Online softmax update (statistics kept in f32).
        m_prev = m_ref[...]
        m_next = jnp.maximum(m_prev, jnp.max(s, axis=-1, keepdims=True))
        alpha = jnp.exp(m_prev - m_next)
        p = jnp.exp(s - m_next)
        l_ref[...] = alpha * l_ref[...] + jnp.sum(p, axis=-1, keepdims=True)
        acc_ref[...] = alpha * acc_ref[...] + lax.dot_general(
            p.astype(v.dtype), v, dimension_numbers=(((1,), (0,)), ((), ())),
            preferred_element_type=jnp.float32)
        m_ref[...] = m_next

    @pl.when(below_diag)
    def _full_block():
        _accumulate(apply_mask=False)

    @pl.when(on_diag)
    def _masked_block():
        _accumulate(apply_mask=True)

    @pl.when(ki == nk - 1)
    def _finalize():
        # Every q row saw at least kv block 0 (column 0 is always unmasked), so
        # l > 0 here.  Exact reciprocal + multiply keeps the f32 tolerance tight.
        inv_l = pl.reciprocal(l_ref[...], approx=False)
        o_ref[...] = (acc_ref[...] * inv_l).astype(o_ref.dtype)


def causal_attention(q, k, v):
    """q, k, v: (B, H, S, d_k) -> (B, H, S, d_k) causal softmax attention.
    NOTE: assumes the 1/sqrt(d_k) scale is already folded into q."""
    B, H, S, d_k = q.shape

    # Pad S to a multiple of 8 so a tile always exists; padded kv columns are
    # automatically masked by causality (their index > any real row index) and
    # padded q rows are sliced off below.
    S_pad = _round_up(S, 8)
    if S_pad != S:
        pad = ((0, 0), (0, 0), (0, S_pad - S), (0, 0))
        q = jnp.pad(q, pad)
        k = jnp.pad(k, pad)
        v = jnp.pad(v, pad)

    tq = _pick_tile(S_pad, 256, 8)
    tk = _pick_tile(S_pad, 256, 8)
    grid = (B, H, S_pad // tq, S_pad // tk)

    def q_map(b, h, qi, ki):
        return (b, h, qi, 0)

    def kv_map(b, h, qi, ki):
        # Clamp to the last kv block this q block can see: skipped (above-diagonal)
        # steps keep the previous block index, so Pallas does not re-DMA K/V.
        last_valid = (qi * tq + (tq - 1)) // tk
        return (b, h, jnp.minimum(ki, last_valid), 0)

    n_q = S_pad // tq
    out = pl.pallas_call(
        partial(_flash_attention_kernel, tq=tq, tk=tk),
        out_shape=jax.ShapeDtypeStruct((B, H, S_pad, d_k), q.dtype),
        grid_spec=pltpu.PrefetchScalarGridSpec(
            num_scalar_prefetch=0,
            grid=grid,
            in_specs=[
                pl.BlockSpec((None, None, tq, d_k), q_map),
                pl.BlockSpec((None, None, tk, d_k), kv_map),
                pl.BlockSpec((None, None, tk, d_k), kv_map),
            ],
            out_specs=pl.BlockSpec((None, None, tq, d_k), q_map),
            scratch_shapes=[
                pltpu.VMEM((tq, 1), jnp.float32),     # running max m
                pltpu.VMEM((tq, 1), jnp.float32),     # running sum l
                pltpu.VMEM((tq, d_k), jnp.float32),   # f32 output accumulator
            ],
        ),
        compiler_params=pltpu.CompilerParams(
            dimension_semantics=("parallel", "parallel", "parallel", "arbitrary"),
            vmem_limit_bytes=_VMEM_LIMIT),
        cost_estimate=pl.CostEstimate(
            flops=2 * B * H * S_pad * S_pad * d_k,        # ~causal half of dense
            transcendentals=B * H * S_pad * S_pad // 2,
            # q + out once; k + v re-read ~ (n_q + 1)/2 times thanks to the clamp.
            bytes_accessed=int((2 * B * H * S_pad * d_k
                                + 2 * B * H * S_pad * d_k * max(1, (n_q + 1) // 2))
                               * q.dtype.itemsize)),
    )(q, k, v)
    return out[:, :, :S, :] if S_pad != S else out


# ----------------------------------------------------------------------------
# Full module forward (mirrors Attention.forward with kv_cache=None)
# ----------------------------------------------------------------------------
def attention_forward(params, q, k, v, *, num_heads, groups):
    B, S, D = q.shape
    d_k = D // num_heads
    hpg = num_heads // groups
    scale = 1.0 / math.sqrt(d_k)

    # Per-output-column scale rows: 1/sqrt(d_k) folded into the Wq columns.
    q_scale = jnp.full((D,), scale, jnp.float32)
    ones_d = jnp.ones((D,), jnp.float32)

    if (q is k) and (k is v):
        # Self-attention: fused QKV projection -> x read from HBM once.
        w_qkv = jnp.concatenate([params["wq_w"], params["wk_w"], params["wv_w"]], axis=0)
        b_qkv = jnp.concatenate([params["wq_b"], params["wk_b"], params["wv_b"]], axis=0)
        s_qkv = jnp.concatenate([q_scale, ones_d, ones_d], axis=0)
        qkv = linear(q.reshape(B * S, D), w_qkv, b_qkv, s_qkv)          # (B*S, 3D)
        q_p = qkv[:, :D].reshape(B, S, D)
        k_p = qkv[:, D:2 * D].reshape(B, S, D)
        v_p = qkv[:, 2 * D:].reshape(B, S, D)
    else:
        q_p = linear(q.reshape(B * S, D), params["wq_w"], params["wq_b"], q_scale).reshape(B, S, D)
        k_p = linear(k.reshape(B * S, D), params["wk_w"], params["wk_b"]).reshape(B, S, D)
        v_p = linear(v.reshape(B * S, D), params["wv_w"], params["wv_b"]).reshape(B, S, D)

    # (B, S, D) -> (B, H, S, d_k).  The K/V transposes are also required to build
    # the module's (B, groups, hpg, S, d_k) kv-cache return value.
    def split_heads(x):
        return jnp.transpose(x.reshape(B, S, num_heads, d_k), (0, 2, 1, 3))

    qh = split_heads(q_p)    # already carries 1/sqrt(d_k)
    kh = split_heads(k_p)
    vh = split_heads(v_p)

    # TODO(synk): kv_cache concatenation path (dynamic key/value length) not implemented.

    out_h = causal_attention(qh, kh, vh)                     # (B, H, S, d_k)

    # (B, H, S, d_k) -> (B, S, D)   (matches permute(0,3,1,2,4).view in PyTorch)
    out = jnp.transpose(out_h, (0, 2, 1, 3)).reshape(B * S, D)
    out = linear(out, params["wo_w"], params["wo_b"]).reshape(B, S, D)

    key_cache = kh.reshape(B, groups, hpg, S, d_k)
    val_cache = vh.reshape(B, groups, hpg, S, d_k)
    return out, (key_cache, val_cache)


# ----------------------------------------------------------------------------
# Pure-JAX reference (for sanity check)
# ----------------------------------------------------------------------------
def reference_forward(params, q, k, v, *, num_heads, groups):
    B, S, D = q.shape
    d_k = D // num_heads
    hg = num_heads // groups

    def proj(name, x):
        return x @ params[name + "_w"].T + params[name + "_b"]

    def split(x):
        return jnp.transpose(x.reshape(B, S, groups, hg, d_k), (0, 2, 3, 1, 4))

    query, key, value = split(proj("wq", q)), split(proj("wk", k)), split(proj("wv", v))
    att = jnp.einsum("bghqd,bghkd->bghqk", query, key) / math.sqrt(d_k)
    mask = jnp.tril(jnp.ones((S, S)))
    att = jnp.where(mask == 0, -jnp.inf, att)
    att = jax.nn.softmax(att, axis=-1)
    out = jnp.einsum("bghqk,bghkd->bghqd", att, value)
    out = jnp.transpose(out, (0, 3, 1, 2, 4)).reshape(B, S, D)
    return out @ params["wo_w"].T + params["wo_b"], (key, value)


# ----------------------------------------------------------------------------
# Deterministic parameter init (nn.Linear-style uniform(-1/sqrt(fan_in), ...))
# ----------------------------------------------------------------------------
def init_params(key, d_model):
    bound = 1.0 / math.sqrt(d_model)
    names = ["wq", "wk", "wv", "wo"]
    params = {}
    keys = jax.random.split(key, 2 * len(names))
    for i, n in enumerate(names):
        params[n + "_w"] = jax.random.uniform(
            keys[2 * i], (d_model, d_model), jnp.float32, -bound, bound)
        params[n + "_b"] = jax.random.uniform(
            keys[2 * i + 1], (d_model,), jnp.float32, -bound, bound)
    return params


if __name__ == "__main__":
    # Small config consistent with LlamaConfig constraints:
    # d_model % num_heads == 0, num_heads % groups == 0
    B, S, D = 2, 8, 32
    NUM_HEADS, GROUPS = 4, 2

    root = jax.random.PRNGKey(0)
    kp, kx, kq, kk_, kv_ = jax.random.split(root, 5)
    params = init_params(kp, D)

    # --- Self-attention path (q is k is v): exercises the fused QKV projection.
    x = jax.random.normal(kx, (B, S, D), jnp.float32)
    out, (key_cache, val_cache) = attention_forward(
        params, x, x, x, num_heads=NUM_HEADS, groups=GROUPS)
    jax.block_until_ready(out)
    jax.block_until_ready(key_cache)
    jax.block_until_ready(val_cache)

    ref_out, (ref_key, ref_val) = reference_forward(
        params, x, x, x, num_heads=NUM_HEADS, groups=GROUPS)
    assert out.shape == (B, S, D)
    assert key_cache.shape == (B, GROUPS, NUM_HEADS // GROUPS, S, D // NUM_HEADS)
    assert jnp.allclose(out, ref_out, atol=5e-4, rtol=5e-4), "fused-path output mismatch"
    assert jnp.allclose(key_cache, ref_key, atol=5e-4, rtol=5e-4)
    assert jnp.allclose(val_cache, ref_val, atol=5e-4, rtol=5e-4)

    # --- Distinct q/k/v tensors: exercises the separate-projection fallback.
    q = jax.random.normal(kq, (B, S, D), jnp.float32)
    k = jax.random.normal(kk_, (B, S, D), jnp.float32)
    v = jax.random.normal(kv_, (B, S, D), jnp.float32)
    out2, (kc2, vc2) = attention_forward(
        params, q, k, v, num_heads=NUM_HEADS, groups=GROUPS)
    jax.block_until_ready(out2)
    ref2, (rk2, rv2) = reference_forward(
        params, q, k, v, num_heads=NUM_HEADS, groups=GROUPS)
    assert jnp.allclose(out2, ref2, atol=5e-4, rtol=5e-4), "separate-path output mismatch"
    assert jnp.allclose(kc2, rk2, atol=5e-4, rtol=5e-4)
    assert jnp.allclose(vc2, rv2, atol=5e-4, rtol=5e-4)

    print("KERNEL_OK")
</pallas_src>

<mosaic_0001>
module attributes {stable_mosaic.version = 11 : i64} {
  func.func @_linear_kernel(%arg0: i32, %arg1: i32, %arg2: i32, %arg3: memref<16x32xf32, #tpu.memory_space<vmem>>, %arg4: memref<96x32xf32, #tpu.memory_space<vmem>>, %arg5: memref<1x96xf32, #tpu.memory_space<vmem>>, %arg6: memref<1x96xf32, #tpu.memory_space<vmem>>, %arg7: memref<16x96xf32, #tpu.memory_space<vmem>>, %arg8: memref<16x96xf32, #tpu.memory_space<vmem>>) attributes {dimension_semantics = [#tpu.dimension_semantics<parallel>, #tpu.dimension_semantics<parallel>, #tpu.dimension_semantics<arbitrary>], iteration_bounds = array<i64: 1, 1, 1>, scalar_prefetch = 0 : i64, scratch_operands = 1 : i64, tpu.core_type = #tpu.core_type<tc>, window_params = [{transform_indices = @transform_0, window_bounds = array<i64: 16, 32>}, {transform_indices = @transform_1, window_bounds = array<i64: 96, 32>}, {transform_indices = @transform_2, window_bounds = array<i64: 1, 96>}, {transform_indices = @transform_3, window_bounds = array<i64: 1, 96>}, {transform_indices = @transform_4, window_bounds = array<i64: 16, 96>}]} {
    %c0_i32 = arith.constant 0 : i32
    %0 = arith.cmpi eq, %arg2, %c0_i32 : i32
    %1 = arith.extui %0 : i1 to i32
    %c0_i32_0 = arith.constant 0 : i32
    %2 = arith.cmpi ne, %1, %c0_i32_0 : i32
    scf.if %2 {
      %cst_10 = arith.constant 0.000000e+00 : f32
      %12 = vector.broadcast %cst_10 : f32 to vector<16x96xf32>
      %c0_11 = arith.constant 0 : index
      %c0_12 = arith.constant 0 : index
      %13 = vector.load %arg8[%c0_11, %c0_12] : memref<16x96xf32, #tpu.memory_space<vmem>>, vector<16x96xf32>
      tpu.vector_store %arg8[%c0_11, %c0_12], %12 {strides = array<i32>} : memref<16x96xf32, #tpu.memory_space<vmem>>, vector<16x96xf32>,
    } else {
    }
    %c0 = arith.constant 0 : index
    %c0_1 = arith.constant 0 : index
    %3 = vector.load %arg8[%c0, %c0_1] : memref<16x96xf32, #tpu.memory_space<vmem>>, vector<16x96xf32>
    %c0_2 = arith.constant 0 : index
    %c0_3 = arith.constant 0 : index
    %4 = vector.load %arg3[%c0_2, %c0_3] : memref<16x32xf32, #tpu.memory_space<vmem>>, vector<16x32xf32>
    %c0_4 = arith.constant 0 : index
    %c0_5 = arith.constant 0 : index
    %5 = vector.load %arg4[%c0_4, %c0_5] : memref<96x32xf32, #tpu.memory_space<vmem>>, vector<96x32xf32>
    %cst = arith.constant dense<0.000000e+00> : vector<16x96xf32>
    %6 = tpu.matmul %4, %5, %cst {dimension_numbers = #tpu.dot_dimension_numbers<[1], [1], [0], [0], [0, 0, 1, 0], [], []>} : vector<16x32xf32>, vector<96x32xf32>, vector<16x96xf32> -> vector<16x96xf32>
    %7 = arith.addf %3, %6 : vector<16x96xf32>
    %c0_6 = arith.constant 0 : index
    %c0_7 = arith.constant 0 : index
    %8 = vector.load %arg8[%c0_6, %c0_7] : memref<16x96xf32, #tpu.memory_space<vmem>>, vector<16x96xf32>
    tpu.vector_store %arg8[%c0_6, %c0_7], %7 {strides = array<i32>} : memref<16x96xf32, #tpu.memory_space<vmem>>, vector<16x96xf32>,
    %c0_i32_8 = arith.constant 0 : i32
    %9 = arith.cmpi eq, %arg2, %c0_i32_8 : i32
    %10 = arith.extui %9 : i1 to i32
    %c0_i32_9 = arith.constant 0 : i32
    %11 = arith.cmpi ne, %10, %c0_i32_9 : i32
    scf.if %11 {
      %c0_10 = arith.constant 0 : index
      %c0_11 = arith.constant 0 : index
      %12 = vector.load %arg8[%c0_10, %c0_11] : memref<16x96xf32, #tpu.memory_space<vmem>>, vector<16x96xf32>
      %c0_12 = arith.constant 0 : index
      %c0_13 = arith.constant 0 : index
      %13 = vector.load %arg5[%c0_12, %c0_13] : memref<1x96xf32, #tpu.memory_space<vmem>>, vector<1x96xf32>
      %14 = vector.broadcast %13 : vector<1x96xf32> to vector<16x96xf32>
      %15 = arith.addf %12, %14 : vector<16x96xf32>
      %c0_14 = arith.constant 0 : index
      %c0_15 = arith.constant 0 : index
      %16 = vector.load %arg6[%c0_14, %c0_15] : memref<1x96xf32, #tpu.memory_space<vmem>>, vector<1x96xf32>
      %17 = vector.broadcast %16 : vector<1x96xf32> to vector<16x96xf32>
      %18 = arith.mulf %15, %17 : vector<16x96xf32>
      %c0_16 = arith.constant 0 : index
      %c0_17 = arith.constant 0 : index
      %19 = vector.load %arg7[%c0_16, %c0_17] : memref<16x96xf32, #tpu.memory_space<vmem>>, vector<16x96xf32>
      tpu.vector_store %arg7[%c0_16, %c0_17], %18 {strides = array<i32>} : memref<16x96xf32, #tpu.memory_space<vmem>>, vector<16x96xf32>,
    } else {
    }
    return
  }
  func.func @transform_0(%arg0: i32, %arg1: i32, %arg2: i32) -> (i32, i32) {
    %c0_i32 = arith.constant 0 : i32
    return %arg0, %arg2 : i32, i32
  }
  func.func @transform_1(%arg0: i32, %arg1: i32, %arg2: i32) -> (i32, i32) {
    %c0_i32 = arith.constant 0 : i32
    return %arg1, %arg2 : i32, i32
  }
  func.func @transform_2(%arg0: i32, %arg1: i32, %arg2: i32) -> (i32, i32) {
    %c0_i32 = arith.constant 0 : i32
    %c0_i32_0 = arith.constant 0 : i32
    return %c0_i32, %arg1 : i32, i32
  }
  func.func @transform_3(%arg0: i32, %arg1: i32, %arg2: i32) -> (i32, i32) {
    %c0_i32 = arith.constant 0 : i32
    %c0_i32_0 = arith.constant 0 : i32
    return %c0_i32, %arg1 : i32, i32
  }
  func.func @transform_4(%arg0: i32, %arg1: i32, %arg2: i32) -> (i32, i32) {
    %c0_i32 = arith.constant 0 : i32
    return %arg0, %arg1 : i32, i32
  }
}

</mosaic_0001>

<llo_original>
// kernel: tpu_custom_call.1
$region0: #{tpu_custom_call.1}
  #allocation0 [shape = 'u32[]', space=smem, size = 0x4, offset = 0x4, fixed_abs, tag = 'smem constant byte address 0x4 - core index']
  #allocation1 [shape = 'u32[72,128]{1,0:T(1,128)}', space=vmem, size = 0x9000, scoped, tag = 'internal scratch']
  #allocation2 [shape = 'f32[16,96]{1,0:T(8,128)}', space=vmem, size = 0x2000, scoped, tag = 'scratch operand']
  %s0 = inlined_call_operand.vmem [shape: f32[16,32], index: 0, kind: input, shape index: {}]
  %s1 = inlined_call_operand.vmem [shape: f32[96,32], index: 1, kind: input, shape index: {}]
  %s2 = inlined_call_operand.vmem [shape: f32[1,96], index: 2, kind: input, shape index: {}]
  %s3 = inlined_call_operand.vmem [shape: f32[1,96], index: 3, kind: input, shape index: {}]
  %s4 = inlined_call_operand.hbm [shape: f32[16,96], index: 4, kind: output, shape index: {}]
  %s5 = sld [smem:[#allocation0]]
  $region34: #{tpu_custom_call.1} parent=0
    _
  %s7 = ssub.s32 1, %s5
  %s8 = scalar_select 0, %s7, %s5
  $region1: #{tpu_custom_call.1} parent=0
    #allocation3 [shape = 'u8[8192]{0}', space=vmem, size = 0x2000, scoped, tag = 'output window, operand 0, single buffered']
    #allocation4 [shape = 's32[1]{0}', space=sflag, size = 0x4, scoped, tag = 'scoped memory for tpu_custom_call.1']
    %9 = vsyncpa [#allocation4], 0
    // Predicated region
    $region2: #{tpu_custom_call.1} parent=1 // pred_check
      _
    $region3: #{tpu_custom_call.1} parent=1 // pred_check_branch
      %11 = sbr.rel (0) target = $region5
    $region4: #{tpu_custom_call.1} parent=1 // pred_region
      _
    $region5: #{tpu_custom_call.1} parent=1 // pred_fallthru
      _
    // Predicated region
    $region6: #{tpu_custom_call.1} parent=1 // pred_check
      _
    $region7: #{tpu_custom_call.1} parent=1 // pred_check_branch
      %13 = sbr.rel (0) target = $region9
    $region8: #{tpu_custom_call.1} parent=1 // pred_region
      _
    $region9: #{tpu_custom_call.1} parent=1 // pred_fallthru
      _
    // Predicated region
    $region10: #{tpu_custom_call.1} parent=1 // pred_check
      _
    $region11: #{tpu_custom_call.1} parent=1 // pred_check_branch
      %15 = sbr.rel (0) target = $region13
    $region12: #{tpu_custom_call.1} parent=1 // pred_region
      _
    $region13: #{tpu_custom_call.1} parent=1 // pred_fallthru
      _
    // Predicated region
    $region14: #{tpu_custom_call.1} parent=1 // pred_check
      _
    $region15: #{tpu_custom_call.1} parent=1 // pred_check_branch
      %17 = sbr.rel (0) target = $region17
    $region16: #{tpu_custom_call.1} parent=1 // pred_region
      _
    $region17: #{tpu_custom_call.1} parent=1 // pred_fallthru
      _
    %p18 = scmp.eq.s32.totalorder 0, 0
    // Predicated region
    $region18: #{tpu_custom_call.1} parent=1 // pred_check
      %p19 = pneg %p18
    $region19: #{tpu_custom_call.1} parent=1 // pred_check_branch
      %21 = sbr.rel (%p19) target = $region21
    $region20: #{tpu_custom_call.1} parent=1 // pred_region
      %vm22 = vcmask 785408
      %23 = vst.msk [vmem:[#allocation2] sm:$0xff] %vm22, 0.0
      %24 = vst.msk [vmem:[#allocation2 + $0x8] sm:$0xff] %vm22, 0.0
    $region21: #{tpu_custom_call.1} parent=1 // pred_fallthru
      _
    %v25 = vld [vmem:[#allocation2] sm:$0xff]
    %v26 = vld [vmem:[#allocation2 + $0x8] sm:$0xff]
    %v27 = vld [vmem:[%s0] sm:$0xff]
    %v28 = vld [vmem:[%s0 + $0x8] sm:$0xff]
    %v29 = vld [vmem:[%s1] sm:$0xff]
    %v30 = vld [vmem:[%s1 + $0x8] sm:$0xff]
    %v31 = vld [vmem:[%s1 + $0x10] sm:$0xff]
    %v32 = vld [vmem:[%s1 + $0x18] sm:$0xff]
    %v33 = vld [vmem:[%s1 + $0x20] sm:$0xff]
    %v34 = vld [vmem:[%s1 + $0x28] sm:$0xff]
    %v35 = vld [vmem:[%s1 + $0x30] sm:$0xff]
    %v36 = vld [vmem:[%s1 + $0x38] sm:$0xff]
    %v37 = vld [vmem:[%s1 + $0x40] sm:$0xff]
    %v38 = vld [vmem:[%s1 + $0x48] sm:$0xff]
    %v39 = vld [vmem:[%s1 + $0x50] sm:$0xff]
    %v40 = vld [vmem:[%s1 + $0x58] sm:$0xff]
    %vm41 = vcmask 261120
    %v43 = vsel %vm41, %v27, 0
    %v46 = vsel %vm41, %v28, 0
    %v49 = vsel %vm41, %v29, 0
    %v52 = vsel %vm41, %v30, 0
    %v55 = vsel %vm41, %v31, 0
    %v58 = vsel %vm41, %v32, 0
    %v61 = vsel %vm41, %v33, 0
    %v64 = vsel %vm41, %v34, 0
    %v67 = vsel %vm41, %v35, 0
    %v70 = vsel %vm41, %v36, 0
    %v73 = vsel %vm41, %v37, 0
    %v76 = vsel %vm41, %v38, 0
    %v79 = vsel %vm41, %v39, 0
    %v82 = vsel %vm41, %v40, 0
    %84 = vmatpush.xpose.msra.mxu0 0.0
    %85 = vmatpush.xpose.msra.mxu0 0.0
    %86 = vmatpush.xpose.msra.mxu0 0.0
    %87 = vmatpush.xpose.msra.mxu0 0.0
    %88 = vmatpush.xpose.msra.mxu0 %v82
    %89 = vmatpush.xpose.msra.mxu0 %v79
    %90 = vmatpush.xpose.msra.mxu0 %v76
    %91 = vmatpush.xpose.msra.mxu0 %v73
    %92 = vmatpush.xpose.msra.mxu0 %v70
    %93 = vmatpush.xpose.msra.mxu0 %v67
    %94 = vmatpush.xpose.msra.mxu0 %v64
    %95 = vmatpush.xpose.msra.mxu0 %v61
    %96 = vmatpush.xpose.msra.mxu0 %v58
    %97 = vmatpush.xpose.msra.mxu0 %v55
    %98 = vmatpush.xpose.msra.mxu0 %v52
    %99 = vmatpush.xpose.msra.mxu0 %v49
    %100 = vmatmul.f32.gmra.mxu0 %v43
    %v101 = vpop.f32.mrf.mxu0
    %v102 = vadd.f32 0.0, %v101
    %103 = vmatmul.f32.gmra.mxu0 %v46
    %v104 = vpop.f32.mrf.mxu0
    %v105 = vadd.f32 0.0, %v104
    %106 = vdwg.mxu0
    %v107 = vadd.f32 %v25, %v102
    %v108 = vadd.f32 %v26, %v105
    %vm109 = vcmask 785408
    %110 = vst.msk [vmem:[#allocation2] sm:$0xff] %vm109, %v107
    %111 = vst.msk [vmem:[#allocation2 + $0x8] sm:$0xff] %vm109, %v108
    // Predicated region
    $region22: #{tpu_custom_call.1} parent=1 // pred_check
      %p112 = pneg %p18
    $region23: #{tpu_custom_call.1} parent=1 // pred_check_branch
      %114 = sbr.rel (%p112) target = $region25
    $region24: #{tpu_custom_call.1} parent=1 // pred_region
      %v115 = vld [vmem:[#allocation2] sm:$0xff]
      %v116 = vld [vmem:[#allocation2 + $0x8] sm:$0xff]
      %v117 = vld [vmem:[%s2] sm:$0x1]
      %v119 = vperm.slane %v117, 0
      %v121 = vadd.f32 %v115, %v119
      %v122 = vadd.f32 %v116, %v119
      %v123 = vld [vmem:[%s3] sm:$0x1]
      %v125 = vperm.slane %v123, 0
      %v127 = vmul.f32 %v121, %v125
      %v128 = vmul.f32 %v122, %v125
      %129 = vst.msk [vmem:[#allocation3] sm:$0xff] %vm109, %v127
      %130 = vst.msk [vmem:[#allocation3 + $0x8] sm:$0xff] %vm109, %v128
    $region25: #{tpu_custom_call.1} parent=1 // pred_fallthru
      _
    // Predicated region
    $region26: #{tpu_custom_call.1} parent=1 // pred_check
      _
    $region27: #{tpu_custom_call.1} parent=1 // pred_check_branch
      %132 = sbr.rel (0) target = $region29
    $region28: #{tpu_custom_call.1} parent=1 // pred_region
      %134 = vsyncadd [#allocation4], 0
      %s135 = sshll.u32 [#allocation3], 4
      %s136 = int_to_ptr.vmem [resolvable:$true] %s135
      %s137 = sshll.u32 %s4, 4
      %s138 = int_to_ptr.hbm [resolvable:$true] %s137
      %143 = dma.vmem_to_hbm [thread:$0]  %s136, 256, %s138, [#allocation4], 128, 128, 8
    $region29: #{tpu_custom_call.1} parent=1 // pred_fallthru
      _
    // Predicated region
    $region30: #{tpu_custom_call.1} parent=1 // pred_check
      _
    $region31: #{tpu_custom_call.1} parent=1 // pred_check_branch
      %145 = sbr.rel (0) target = $region33
    $region32: #{tpu_custom_call.1} parent=1 // pred_region
      %147 = dma.done [#allocation4], 256
    $region33: #{tpu_custom_call.1} parent=1 // pred_fallthru
      _
    %148 = vsyncpa [#allocation4], 1

</llo_original>
